<compile_context>
chip_gen: v7x
topology: tpu7x:2x2x1
jax: 0.10.0
libtpu: 0.0.40
codegen_flags: <defaults>
</compile_context>

<pallas_src>
import functools

import jax
import jax.numpy as jnp
from jax.experimental import pallas as pl
from jax.experimental.pallas import tpu as pltpu


# ---------------------------------------------------------------------------
# Per-generation VMEM limit / tiling helpers
# ---------------------------------------------------------------------------
@functools.lru_cache(maxsize=1)
def _vmem_limit_bytes():
    """Scoped-VMEM limit: ~3/4 of physical, capped at 96 MiB (v5e/v6e=128 MiB,
    v7x=64 MiB physical)."""
    limit = 48 * 1024 * 1024
    try:
        get_info = getattr(pltpu, "get_tpu_info", None)
        if get_info is not None:
            cap = getattr(get_info(), "vmem_capacity_bytes", 0) or 0
            if cap:
                limit = int(min(cap * 3 // 4, 96 * 1024 * 1024))
    except Exception:
        pass
    return limit


def _alpha_lane_cap(cg, cx, ci):
    """Max spatial lanes per alpha tile so double-buffered blocks stay small."""
    budget = min(_vmem_limit_bytes() // 3, 16 * 1024 * 1024)
    bytes_per_lane = 4 * (2 * (cg + cx + 1) + ci)   # dbl-buffered g,x,alpha + f
    cap = budget // max(bytes_per_lane, 1)
    cap = max(512, min(cap, 65536))
    return (cap // 128) * 128


# ---------------------------------------------------------------------------
# Pallas kernels
# ---------------------------------------------------------------------------
def _alpha_kernel(g_ref, x_ref, wg_ref, wx_ref, b_ref, wphi_ref, bphi_ref,
                  o_ref):
    """alpha = sigmoid(wphi . relu(Wg@g + Wx@x_on_g + b) + bphi), g resolution.

    g_ref: (1, Cg, Ts)   x_ref: (1, Cx, Ts)   spatial on lanes, channels on
    sublanes.  Weights stay resident in VMEM (constant index_maps).
    """
    f = (jnp.dot(wg_ref[...], g_ref[0], preferred_element_type=jnp.float32)
         + jnp.dot(wx_ref[...], x_ref[0], preferred_element_type=jnp.float32)
         + b_ref[...])                                          # (Ci, Ts)
    f = jnp.maximum(f, 0.0)
    # conv_phi (Ci -> 1) as a VPU multiply + sublane reduction (MXU not needed).
    phi = jnp.sum(f * wphi_ref[...], axis=0, keepdims=True) + bphi_ref[...]
    o_ref[0] = jax.nn.sigmoid(phi)                              # (1, Ts)


def _gate_kernel(d_tbl_ref, x_ref, a_ref, eh_ref, ew_ref, o_ref):
    """out = x * nearest_upsample(alpha_g).

    x_ref: (1, Cx, 1, Hx, Wx)   one x depth slice (grid = (n, dx)).
    a_ref: (1, 1, 1, Hg, Wg)    the matching g-resolution alpha slice, chosen
                                by the scalar-prefetched depth table.
    eh_ref: (Hx, Hg), ew_ref: (Wg, Wx)  exact 0/1 nearest-selection matrices,
                                resident in VMEM across the whole grid.
    The two tiny matmuls replicate alpha to x resolution on the (idle) MXU,
    so alpha never exists at x resolution in HBM.
    """
    del d_tbl_ref                      # only used inside the index_maps
    a = a_ref[...][0, 0, 0]                                     # (Hg, Wg)
    a_w = jnp.dot(a, ew_ref[...], preferred_element_type=jnp.float32)   # (Hg, Wx)
    a_x = jnp.dot(eh_ref[...], a_w, preferred_element_type=jnp.float32)  # (Hx, Wx)
    o_ref[...] = (x_ref[...] * a_x[None, None, None]).astype(o_ref.dtype)


# ---------------------------------------------------------------------------
# pallas_call wrappers
# ---------------------------------------------------------------------------
def attention_alpha(g3, x3g, w_g, w_x, b, wphi, bphi):
    """g3: (N, Cg, Sg), x3g: (N, Cx, Sg) -> alpha (N, 1, Sg) float32."""
    n, cg, s = g3.shape
    _, cx, _ = x3g.shape
    ci = w_g.shape[0]

    cap = _alpha_lane_cap(cg, cx, ci)
    if s <= cap:
        tile, s_p = s, s                       # full-extent block: always legal
    else:
        tile = cap                             # pad up instead of hunting for an
        s_p = ((s + tile - 1) // tile) * tile  # exact divisor (no 128-lane tiles)
    if s_p != s:                               # only the tiny g-res tensors pad
        g3 = jnp.pad(g3, ((0, 0), (0, 0), (0, s_p - s)))
        x3g = jnp.pad(x3g, ((0, 0), (0, 0), (0, s_p - s)))

    grid = (n, s_p // tile)
    flops = 2 * n * s_p * ci * (cg + cx + 1)
    bytes_acc = 4 * (n * s_p * (cg + cx + 1) + ci * (cg + cx + 2) + 1)

    alpha = pl.pallas_call(
        _alpha_kernel,
        out_shape=jax.ShapeDtypeStruct((n, 1, s_p), jnp.float32),
        grid_spec=pltpu.PrefetchScalarGridSpec(
            num_scalar_prefetch=0,
            grid=grid,
            in_specs=[
                pl.BlockSpec((1, cg, tile), lambda i, j: (i, 0, j)),   # g
                pl.BlockSpec((1, cx, tile), lambda i, j: (i, 0, j)),   # x on g
                pl.BlockSpec((ci, cg), lambda i, j: (0, 0)),           # conv_g W
                pl.BlockSpec((ci, cx), lambda i, j: (0, 0)),           # conv_x W
                pl.BlockSpec((ci, 1), lambda i, j: (0, 0)),            # bg + bx
                pl.BlockSpec((ci, 1), lambda i, j: (0, 0)),            # conv_phi W
                pl.BlockSpec((1, 1), lambda i, j: (0, 0)),             # conv_phi b
            ],
            out_specs=pl.BlockSpec((1, 1, tile), lambda i, j: (i, 0, j)),
        ),
        compiler_params=pltpu.CompilerParams(
            dimension_semantics=("parallel", "parallel"),
            vmem_limit_bytes=_vmem_limit_bytes()),
        cost_estimate=pl.CostEstimate(flops=int(flops),
                                      transcendentals=int(n * s_p),
                                      bytes_accessed=int(bytes_acc)),
    )(g3, x3g, w_g, w_x, b, wphi, bphi)
    if s_p != s:
        alpha = alpha[:, :, :s]
    return alpha


def gated_multiply(x, alpha_g5, d_tbl, eh, ew):
    """x: (N,Cx,Dx,Hx,Wx), alpha_g5: (N,1,Dg,Hg,Wg) -> x * upsampled alpha."""
    n, cx, dx, hx, wx = x.shape
    _, _, dg, hg, wg = alpha_g5.shape

    flops = n * dx * (2 * hg * wg * wx + 2 * hx * hg * wx + cx * hx * wx)
    bytes_acc = 4 * (2 * n * cx * dx * hx * wx + n * dx * hg * wg
                     + hx * hg + wg * wx)

    out = pl.pallas_call(
        _gate_kernel,
        out_shape=jax.ShapeDtypeStruct(x.shape, x.dtype),
        grid_spec=pltpu.PrefetchScalarGridSpec(
            num_scalar_prefetch=1,            # d_tbl: x-depth -> alpha-depth
            grid=(n, dx),
            in_specs=[
                pl.BlockSpec((1, cx, 1, hx, wx),
                             lambda i, d, dref: (i, 0, d, 0, 0)),
                pl.BlockSpec((1, 1, 1, hg, wg),
                             lambda i, d, dref: (i, 0, dref[d], 0, 0)),
                pl.BlockSpec((hx, hg), lambda i, d, dref: (0, 0)),
                pl.BlockSpec((wg, wx), lambda i, d, dref: (0, 0)),
            ],
            out_specs=pl.BlockSpec((1, cx, 1, hx, wx),
                                   lambda i, d, dref: (i, 0, d, 0, 0)),
        ),
        compiler_params=pltpu.CompilerParams(
            dimension_semantics=("parallel", "parallel"),
            vmem_limit_bytes=_vmem_limit_bytes()),
        cost_estimate=pl.CostEstimate(flops=int(flops), transcendentals=0,
                                      bytes_accessed=int(bytes_acc)),
    )(d_tbl, x, alpha_g5, eh, ew)
    return out


# ---------------------------------------------------------------------------
# Glue: nearest interpolation indices (PyTorch F.interpolate mode='nearest')
# ---------------------------------------------------------------------------
def _nearest_idx(out_size, in_size):
    # PyTorch legacy nearest: src = min(floor(dst * in/out), in-1)
    scale = in_size / out_size
    idx = jnp.floor(jnp.arange(out_size) * scale).astype(jnp.int32)
    return jnp.minimum(idx, in_size - 1)


def attention_gate_3d(x, g, params, attention=False):
    """x: (N, Cx, Dx, Hx, Wx), g: (N, Cg, Dg, Hg, Wg) in PyTorch NCDHW layout."""
    n, cx, dx, hx, wx = x.shape
    _, cg, dg, hg, wg = g.shape
    sg = dg * hg * wg
    sx = dx * hx * wx

    # --- x -> g resolution: ONE flat nearest gather (g-scale traffic only;
    #     nearest resample commutes with the 1x1x1 conv_x). ---
    di = _nearest_idx(dg, dx)
    hi = _nearest_idx(hg, hx)
    wi = _nearest_idx(wg, wx)
    flat_dn = (di[:, None, None] * (hx * wx)
               + hi[None, :, None] * wx
               + wi[None, None, :]).reshape(-1)                 # (Sg,)
    x_on_g = jnp.take(x.reshape(n, cx, sx), flat_dn, axis=2)    # (N, Cx, Sg)

    # --- alpha at g resolution (lane-dense flat spatial) ---
    alpha_g = attention_alpha(g.reshape(n, cg, sg), x_on_g,
                              params["wg"], params["wx"],
                              params["bg"] + params["bx"],
                              params["wphi"], params["bphi"])   # (N, 1, Sg)
    alpha_g5 = alpha_g.reshape(n, 1, dg, hg, wg)                # free reshape

    # --- nearest-upsample tables for the fused gate kernel ---
    di2 = _nearest_idx(dx, dg)                                  # (Dx,) int32
    hi2 = _nearest_idx(hx, hg)
    wi2 = _nearest_idx(wx, wg)
    eh = (hi2[:, None] == jnp.arange(hg)[None, :]).astype(jnp.float32)  # (Hx,Hg)
    ew = (jnp.arange(wg)[:, None] == wi2[None, :]).astype(jnp.float32)  # (Wg,Wx)

    out = gated_multiply(x, alpha_g5, di2, eh, ew)

    if attention:
        # Materialize x-resolution alpha only when the caller asks for it.
        flat_up = (di2[:, None, None] * (hg * wg)
                   + hi2[None, :, None] * wg
                   + wi2[None, None, :]).reshape(-1)            # (Sx,)
        alpha_x = jnp.take(alpha_g, flat_up, axis=2).reshape(n, 1, dx, hx, wx)
        return out, alpha_x
    return out


# ---------------------------------------------------------------------------
# Pure-JAX reference (mirrors the PyTorch forward exactly)
# ---------------------------------------------------------------------------
def reference(x, g, params):
    _, _, dxr, hxr, wxr = x.shape
    _, _, dgr, hgr, wgr = g.shape
    g_emb = jnp.einsum("ncdhw,kc->nkdhw", g, params["wg"]) \
        + params["bg"].reshape(1, -1, 1, 1, 1)
    x_emb_full = jnp.einsum("ncdhw,kc->nkdhw", x, params["wx"]) \
        + params["bx"].reshape(1, -1, 1, 1, 1)
    di = _nearest_idx(dgr, dxr); hi = _nearest_idx(hgr, hxr); wi = _nearest_idx(wgr, wxr)
    x_emb = x_emb_full[:, :, di][:, :, :, hi][:, :, :, :, wi]
    f = jnp.maximum(g_emb + x_emb, 0.0)
    phi = jnp.einsum("nkdhw,ko->nodhw", f, params["wphi"]) \
        + params["bphi"].reshape(1, -1, 1, 1, 1)
    sig = jax.nn.sigmoid(phi)
    di2 = _nearest_idx(dxr, dgr); hi2 = _nearest_idx(hxr, hgr); wi2 = _nearest_idx(wxr, wgr)
    alpha = sig[:, :, di2][:, :, :, hi2][:, :, :, :, wi2]
    return x * alpha, alpha


# ---------------------------------------------------------------------------
def _run_case(case_id, n, cx, cg, ci, x_sp, g_sp):
    key = jax.random.fold_in(jax.random.PRNGKey(0), case_id)
    kx, kg, k1, k2, k3, k4, k5, k6 = jax.random.split(key, 8)
    x = jax.random.normal(kx, (n, cx) + x_sp, jnp.float32)
    g = jax.random.normal(kg, (n, cg) + g_sp, jnp.float32)
    # Conv3d 1x1x1 weights as (C_out, C_in) matrices, biases as (C_out, 1).
    params = dict(
        wg=0.2 * jax.random.normal(k1, (ci, cg), jnp.float32),
        bg=0.1 * jax.random.normal(k2, (ci, 1), jnp.float32),
        wx=0.2 * jax.random.normal(k3, (ci, cx), jnp.float32),
        bx=0.1 * jax.random.normal(k4, (ci, 1), jnp.float32),
        wphi=0.2 * jax.random.normal(k5, (ci, 1), jnp.float32),
        bphi=0.1 * jax.random.normal(k6, (1, 1), jnp.float32),
    )
    out, alpha = attention_gate_3d(x, g, params, attention=True)
    out = jax.block_until_ready(out)
    alpha = jax.block_until_ready(alpha)
    ref_out, ref_alpha = reference(x, g, params)
    assert out.shape == x.shape
    assert alpha.shape == (n, 1) + x_sp
    assert jnp.allclose(out, ref_out, atol=1e-5, rtol=1e-5)
    assert jnp.allclose(alpha, ref_alpha, atol=1e-5, rtol=1e-5)


if __name__ == "__main__":
    # Standard 2x downsample factors.
    _run_case(0, n=2, cx=4, cg=6, ci=8, x_sp=(8, 8, 8), g_sp=(4, 4, 4))
    # Non-integer resize factors exercise the general nearest-selection path.
    _run_case(1, n=2, cx=4, cg=6, ci=8, x_sp=(6, 10, 12), g_sp=(4, 4, 4))
    print("KERNEL_OK")
</pallas_src>

<mosaic_0001>
module attributes {stable_mosaic.version = 11 : i64} {
  func.func @_alpha_kernel(%arg0: i32, %arg1: i32, %arg2: memref<1x6x64xf32, #tpu.memory_space<vmem>>, %arg3: memref<1x4x64xf32, #tpu.memory_space<vmem>>, %arg4: memref<8x6xf32, #tpu.memory_space<vmem>>, %arg5: memref<8x4xf32, #tpu.memory_space<vmem>>, %arg6: memref<8x1xf32, #tpu.memory_space<vmem>>, %arg7: memref<8x1xf32, #tpu.memory_space<vmem>>, %arg8: memref<1x1xf32, #tpu.memory_space<vmem>>, %arg9: memref<1x1x64xf32, #tpu.memory_space<vmem>>) attributes {dimension_semantics = [#tpu.dimension_semantics<parallel>, #tpu.dimension_semantics<parallel>], iteration_bounds = array<i64: 2, 1>, scalar_prefetch = 0 : i64, scratch_operands = 0 : i64, tpu.core_type = #tpu.core_type<tc>, window_params = [{transform_indices = @transform_0, window_bounds = array<i64: 1, 6, 64>}, {transform_indices = @transform_1, window_bounds = array<i64: 1, 4, 64>}, {pipeline_mode = #tpu.pipeline_mode<synchronous>, transform_indices = @transform_2, window_bounds = array<i64: 8, 6>}, {pipeline_mode = #tpu.pipeline_mode<synchronous>, transform_indices = @transform_3, window_bounds = array<i64: 8, 4>}, {pipeline_mode = #tpu.pipeline_mode<synchronous>, transform_indices = @transform_4, window_bounds = array<i64: 8, 1>}, {pipeline_mode = #tpu.pipeline_mode<synchronous>, transform_indices = @transform_5, window_bounds = array<i64: 8, 1>}, {pipeline_mode = #tpu.pipeline_mode<synchronous>, transform_indices = @transform_6, window_bounds = array<i64: 1, 1>}, {transform_indices = @transform_7, window_bounds = array<i64: 1, 1, 64>}]} {
    %c0 = arith.constant 0 : index
    %c0_0 = arith.constant 0 : index
    %0 = vector.load %arg4[%c0, %c0_0] : memref<8x6xf32, #tpu.memory_space<vmem>>, vector<8x6xf32>
    %c0_1 = arith.constant 0 : index
    %c0_2 = arith.constant 0 : index
    %c0_3 = arith.constant 0 : index
    %1 = vector.load %arg2[%c0_1, %c0_2, %c0_3] : memref<1x6x64xf32, #tpu.memory_space<vmem>>, vector<1x6x64xf32>
    %2 = vector.shape_cast %1 : vector<1x6x64xf32> to vector<6x64xf32>
    %cst = arith.constant dense<0.000000e+00> : vector<8x64xf32>
    %3 = tpu.matmul %0, %2, %cst {dimension_numbers = #tpu.dot_dimension_numbers<[1], [0], [0], [1], [0, 0, 1, 1], [], []>} : vector<8x6xf32>, vector<6x64xf32>, vector<8x64xf32> -> vector<8x64xf32>
    %c0_4 = arith.constant 0 : index
    %c0_5 = arith.constant 0 : index
    %4 = vector.load %arg5[%c0_4, %c0_5] : memref<8x4xf32, #tpu.memory_space<vmem>>, vector<8x4xf32>
    %c0_6 = arith.constant 0 : index
    %c0_7 = arith.constant 0 : index
    %c0_8 = arith.constant 0 : index
    %5 = vector.load %arg3[%c0_6, %c0_7, %c0_8] : memref<1x4x64xf32, #tpu.memory_space<vmem>>, vector<1x4x64xf32>
    %6 = vector.shape_cast %5 : vector<1x4x64xf32> to vector<4x64xf32>
    %cst_9 = arith.constant dense<0.000000e+00> : vector<8x64xf32>
    %7 = tpu.matmul %4, %6, %cst_9 {dimension_numbers = #tpu.dot_dimension_numbers<[1], [0], [0], [1], [0, 0, 1, 1], [], []>} : vector<8x4xf32>, vector<4x64xf32>, vector<8x64xf32> -> vector<8x64xf32>
    %8 = arith.addf %3, %7 : vector<8x64xf32>
    %c0_10 = arith.constant 0 : index
    %c0_11 = arith.constant 0 : index
    %9 = vector.load %arg6[%c0_10, %c0_11] : memref<8x1xf32, #tpu.memory_space<vmem>>, vector<8x1xf32>
    %10 = vector.broadcast %9 : vector<8x1xf32> to vector<8x64xf32>
    %11 = arith.addf %8, %10 : vector<8x64xf32>
    %cst_12 = arith.constant 0.000000e+00 : f32
    %12 = vector.broadcast %cst_12 : f32 to vector<8x64xf32>
    %13 = arith.maximumf %11, %12 : vector<8x64xf32>
    %c0_13 = arith.constant 0 : index
    %c0_14 = arith.constant 0 : index
    %14 = vector.load %arg7[%c0_13, %c0_14] : memref<8x1xf32, #tpu.memory_space<vmem>>, vector<8x1xf32>
    %15 = vector.broadcast %14 : vector<8x1xf32> to vector<8x64xf32>
    %16 = arith.mulf %13, %15 : vector<8x64xf32>
    %cst_15 = arith.constant dense<0.000000e+00> : vector<64xf32>
    %17 = vector.multi_reduction <add>, %16, %cst_15 [0] : vector<8x64xf32> to vector<64xf32>
    %18 = vector.shape_cast %17 : vector<64xf32> to vector<1x64xf32>
    %c0_16 = arith.constant 0 : index
    %c0_17 = arith.constant 0 : index
    %19 = vector.load %arg8[%c0_16, %c0_17] : memref<1x1xf32, #tpu.memory_space<vmem>>, vector<1x1xf32>
    %20 = vector.broadcast %19 : vector<1x1xf32> to vector<1x64xf32>
    %21 = arith.addf %18, %20 : vector<1x64xf32>
    %22 = arith.negf %21 : vector<1x64xf32>
    %23 = math.exp %22 : vector<1x64xf32>
    %cst_18 = arith.constant 1.000000e+00 : f32
    %24 = vector.broadcast %cst_18 : f32 to vector<1x64xf32>
    %25 = arith.addf %24, %23 : vector<1x64xf32>
    %26 = arith.divf %24, %25 : vector<1x64xf32>
    %c0_19 = arith.constant 0 : index
    %c0_20 = arith.constant 0 : index
    %c0_21 = arith.constant 0 : index
    %27 = vector.load %arg9[%c0_19, %c0_20, %c0_21] : memref<1x1x64xf32, #tpu.memory_space<vmem>>, vector<1x1x64xf32>
    %28 = vector.shape_cast %27 : vector<1x1x64xf32> to vector<1x64xf32>
    %29 = vector.shape_cast %26 : vector<1x64xf32> to vector<1x1x64xf32>
    tpu.vector_store %arg9[%c0_19, %c0_20, %c0_21], %29 {strides = array<i32>} : memref<1x1x64xf32, #tpu.memory_space<vmem>>, vector<1x1x64xf32>,
    return
  }
  func.func @transform_0(%arg0: i32, %arg1: i32) -> (i32, i32, i32) {
    %c0_i32 = arith.constant 0 : i32
    %c0_i32_0 = arith.constant 0 : i32
    return %arg0, %c0_i32, %arg1 : i32, i32, i32
  }
  func.func @transform_1(%arg0: i32, %arg1: i32) -> (i32, i32, i32) {
    %c0_i32 = arith.constant 0 : i32
    %c0_i32_0 = arith.constant 0 : i32
    return %arg0, %c0_i32, %arg1 : i32, i32, i32
  }
  func.func @transform_2(%arg0: i32, %arg1: i32) -> (i32, i32) {
    %c0_i32 = arith.constant 0 : i32
    %c0_i32_0 = arith.constant 0 : i32
    %c0_i32_1 = arith.constant 0 : i32
    return %c0_i32, %c0_i32_0 : i32, i32
  }
  func.func @transform_3(%arg0: i32, %arg1: i32) -> (i32, i32) {
    %c0_i32 = arith.constant 0 : i32
    %c0_i32_0 = arith.constant 0 : i32
    %c0_i32_1 = arith.constant 0 : i32
    return %c0_i32, %c0_i32_0 : i32, i32
  }
  func.func @transform_4(%arg0: i32, %arg1: i32) -> (i32, i32) {
    %c0_i32 = arith.constant 0 : i32
    %c0_i32_0 = arith.constant 0 : i32
    %c0_i32_1 = arith.constant 0 : i32
    return %c0_i32, %c0_i32_0 : i32, i32
  }
  func.func @transform_5(%arg0: i32, %arg1: i32) -> (i32, i32) {
    %c0_i32 = arith.constant 0 : i32
    %c0_i32_0 = arith.constant 0 : i32
    %c0_i32_1 = arith.constant 0 : i32
    return %c0_i32, %c0_i32_0 : i32, i32
  }
  func.func @transform_6(%arg0: i32, %arg1: i32) -> (i32, i32) {
    %c0_i32 = arith.constant 0 : i32
    %c0_i32_0 = arith.constant 0 : i32
    %c0_i32_1 = arith.constant 0 : i32
    return %c0_i32, %c0_i32_0 : i32, i32
  }
  func.func @transform_7(%arg0: i32, %arg1: i32) -> (i32, i32, i32) {
    %c0_i32 = arith.constant 0 : i32
    %c0_i32_0 = arith.constant 0 : i32
    return %arg0, %c0_i32, %arg1 : i32, i32, i32
  }
}

</mosaic_0001>

<llo_original>
// kernel: tpu_custom_call.1
$region0: #{tpu_custom_call.1}
  #allocation0 [shape = 'u32[]', space=smem, size = 0x4, offset = 0x4, fixed_abs, tag = 'smem constant byte address 0x4 - core index']
  #allocation1 [shape = 'u32[144,128]{1,0:T(1,128)}', space=vmem, size = 0x12000, scoped, tag = 'internal scratch']
  #allocation2 [shape = 'f32[1,1]{1,0:T(1,128)S(1)}', space=vmem, size = 0x200, scoped, tag = 'scoped memory for tpu_custom_call.1']
  %s0 = inlined_call_operand.vmem [shape: f32[2,6,64], index: 0, kind: input, shape index: {}]
  %s1 = inlined_call_operand.vmem [shape: f32[2,4,64], index: 1, kind: input, shape index: {}]
  %s2 = inlined_call_operand.vmem [shape: f32[8,6], index: 2, kind: input, shape index: {}]
  %s3 = inlined_call_operand.vmem [shape: f32[8,4], index: 3, kind: input, shape index: {}]
  %s4 = inlined_call_operand.vmem [shape: f32[8,1], index: 4, kind: input, shape index: {}]
  %s5 = inlined_call_operand.vmem [shape: f32[8,1], index: 5, kind: input, shape index: {}]
  %s6 = inlined_call_operand.<no memory space> [shape: f32[1,1], index: 6, kind: input, shape index: {}]
  %s7 = inlined_call_operand.hbm [shape: f32[2,1,64], index: 7, kind: output, shape index: {}]
  %s8 = sld [smem:[#allocation0]]
  $region61: #{tpu_custom_call.1} parent=0
    _
  %s10 = ssub.s32 1, %s8
  %s11 = scalar_select 0, %s10, %s8
  %v12 = vstv %s6
  %13 = vst [vmem:[#allocation2] sm:$0x1] %v12
  $region1: #{tpu_custom_call.1} parent=0
    #allocation3 [shape = 'u8[1024]{0}', space=vmem, size = 0x400, scoped, tag = 'output window, operand 0']
    #allocation4 [shape = 's32[2]{0}', space=sflag, size = 0x8, scoped, tag = 'scoped memory for tpu_custom_call.1']
    %14 = vsyncpa [#allocation4], 0
    %s15 = scalar_lea.sflag [#allocation4], 1
    %16 = vsyncpa %s15, 0
    loop: start=0, step=1, limit=4
    $region2: #{tpu_custom_call.1} parent=1 // loop_pre_header
      _
    $region3: #{tpu_custom_call.1} parent=1 // loop_header
      %s18 = sphi 0, %s22
      %p19 = scmp.ge.s32.totalorder %s18, 4
      %s25 = sphi 0, %s37
      %s26 = sphi 0, %s33
      %s27 = sphi 0, %s25
      %s28 = sphi 0, %s26
      %s29 = sphi 0, %s27
      %s30 = sphi 0, %s28
      %s42 = sphi 0, %s44
      %s45 = sphi 0, %s42
      %s46 = sphi 0, %s45
      %s62 = sphi 0, %s46
      %s70 = sphi 0, %s72
      %s73 = sphi 0, %s70
      %s74 = sphi 0, %s73
      %s90 = sphi 0, %s74
      %s94 = sphi 0, %s94
      %s96 = sphi 0, %s94
      %s97 = sphi 0, %s96
      %s111 = sphi 0, %s97
      %s115 = sphi 0, %s115
      %s117 = sphi 0, %s115
      %s118 = sphi 0, %s117
      %s132 = sphi 0, %s118
      %s136 = sphi 0, %s136
      %s138 = sphi 0, %s136
      %s139 = sphi 0, %s138
      %s153 = sphi 0, %s139
      %s157 = sphi 0, %s157
      %s159 = sphi 0, %s157
      %s160 = sphi 0, %s159
      %s174 = sphi 0, %s160
      %s178 = sphi 0, %s178
      %s180 = sphi 0, %s178
      %s181 = sphi 0, %s180
      %s195 = sphi 0, %s181
      %s203 = sphi 0, %s205
      %s206 = sphi 0, %s203
      %s207 = sphi 0, %s206
      %s223 = sphi 0, %s207
    $region4: #{tpu_custom_call.1} parent=1 // loop_header_branch
      %21 = sbr.rel (%p19) target = $region8
    $region5: #{tpu_custom_call.1} parent=1 // loop_body
      %s23 = ssub.s32 %s18, 1
      %s24 = ssub.s32 %s18, 2
      %s31 = sadd.s32 1, %s26
      %p32 = scmp.ge.s32.totalorder %s31, 1
      %s33 = scalar_select %p32, 0, %s31
      %s34 = sadd.s32 1, %s25
      %s35 = scalar_select %p32, %s34, %s25
      %p36 = scmp.ge.s32.totalorder %s35, 2
      %s37 = scalar_select %p36, 0, %s35
      %s38 = ssub.s32 %s25, %s37
      %s39 = ssub.s32 %s26, %s33
      %s40 = sor.u32 %s38, %s39
      %p41 = scmp.eq.s32.totalorder %s40, 0
      %s43 = sadd.s32 %s42, 1
      %s44 = scalar_select %p41, %s42, %s43
      %p47 = pneg %p41
      %p48 = scmp.eq.s32.totalorder %s18, 1
      %p49 = por %p47, %p48
      %p50 = scmp.ne.s32.totalorder %s42, %s45
      %p51 = scmp.eq.s32.totalorder %s18, 0
      %p52 = por %p50, %p51
      %p53 = scmp.ne.s32.totalorder %s42, %s45
      %p54 = scmp.eq.s32.totalorder %s23, 1
      %p55 = por %p53, %p54
      %p56 = scmp.ne.s32.totalorder %s45, %s46
      %p57 = scmp.eq.s32.totalorder %s23, 0
      %p58 = por %p56, %p57
      %p59 = scmp.ne.s32.totalorder %s45, %s46
      %p60 = scmp.eq.s32.totalorder %s24, 1
      %p61 = por %p59, %p60
      %p63 = scmp.ne.s32.totalorder %s46, %s62
      %p64 = scmp.eq.s32.totalorder %s24, 0
      %p65 = por %p63, %p64
      %s66 = ssub.s32 %s25, %s37
      %s67 = ssub.s32 %s26, %s33
      %s68 = sor.u32 %s66, %s67
      %p69 = scmp.eq.s32.totalorder %s68, 0
      %s71 = sadd.s32 %s70, 1
      %s72 = scalar_select %p69, %s70, %s71
      %p75 = pneg %p69
      %p76 = scmp.eq.s32.totalorder %s18, 1
      %p77 = por %p75, %p76
      %p78 = scmp.ne.s32.totalorder %s70, %s73
      %p79 = scmp.eq.s32.totalorder %s18, 0
      %p80 = por %p78, %p79
      %p81 = scmp.ne.s32.totalorder %s70, %s73
      %p82 = scmp.eq.s32.totalorder %s23, 1
      %p83 = por %p81, %p82
      %p84 = scmp.ne.s32.totalorder %s73, %s74
      %p85 = scmp.eq.s32.totalorder %s23, 0
      %p86 = por %p84, %p85
      %p87 = scmp.ne.s32.totalorder %s73, %s74
      %p88 = scmp.eq.s32.totalorder %s24, 1
      %p89 = por %p87, %p88
      %p91 = scmp.ne.s32.totalorder %s74, %s90
      %p92 = scmp.eq.s32.totalorder %s24, 0
      %p93 = por %p91, %p92
      %s95 = sadd.s32 %s94, 1
      %p98 = scmp.eq.s32.totalorder %s18, 1
      %p99 = scmp.ne.s32.totalorder %s94, %s96
      %p100 = scmp.eq.s32.totalorder %s18, 0
      %p101 = por %p99, %p100
      %p102 = scmp.ne.s32.totalorder %s94, %s96
      %p103 = scmp.eq.s32.totalorder %s23, 1
      %p104 = por %p102, %p103
      %p105 = scmp.ne.s32.totalorder %s96, %s97
      %p106 = scmp.eq.s32.totalorder %s23, 0
      %p107 = por %p105, %p106
      %p108 = scmp.ne.s32.totalorder %s96, %s97
      %p109 = scmp.eq.s32.totalorder %s24, 1
      %p110 = por %p108, %p109
      %p112 = scmp.ne.s32.totalorder %s97, %s111
      %p113 = scmp.eq.s32.totalorder %s24, 0
      %p114 = por %p112, %p113
      %s116 = sadd.s32 %s115, 1
      %p119 = scmp.eq.s32.totalorder %s18, 1
      %p120 = scmp.ne.s32.totalorder %s115, %s117
      %p121 = scmp.eq.s32.totalorder %s18, 0
      %p122 = por %p120, %p121
      %p123 = scmp.ne.s32.totalorder %s115, %s117
      %p124 = scmp.eq.s32.totalorder %s23, 1
      %p125 = por %p123, %p124
      %p126 = scmp.ne.s32.totalorder %s117, %s118
      %p127 = scmp.eq.s32.totalorder %s23, 0
      %p128 = por %p126, %p127
      %p129 = scmp.ne.s32.totalorder %s117, %s118
      %p130 = scmp.eq.s32.totalorder %s24, 1
      %p131 = por %p129, %p130
      %p133 = scmp.ne.s32.totalorder %s118, %s132
      %p134 = scmp.eq.s32.totalorder %s24, 0
      %p135 = por %p133, %p134
      %s137 = sadd.s32 %s136, 1
      %p140 = scmp.eq.s32.totalorder %s18, 1
      %p141 = scmp.ne.s32.totalorder %s136, %s138
      %p142 = scmp.eq.s32.totalorder %s18, 0
      %p143 = por %p141, %p142
      %p144 = scmp.ne.s32.totalorder %s136, %s138
      %p145 = scmp.eq.s32.totalorder %s23, 1
      %p146 = por %p144, %p145
      %p147 = scmp.ne.s32.totalorder %s138, %s139
      %p148 = scmp.eq.s32.totalorder %s23, 0
      %p149 = por %p147, %p148
      %p150 = scmp.ne.s32.totalorder %s138, %s139
      %p151 = scmp.eq.s32.totalorder %s24, 1
      %p152 = por %p150, %p151
      %p154 = scmp.ne.s32.totalorder %s139, %s153
      %p155 = scmp.eq.s32.totalorder %s24, 0
      %p156 = por %p154, %p155
      %s158 = sadd.s32 %s157, 1
      %p161 = scmp.eq.s32.totalorder %s18, 1
      %p162 = scmp.ne.s32.totalorder %s157, %s159
      %p163 = scmp.eq.s32.totalorder %s18, 0
      %p164 = por %p162, %p163
      %p165 = scmp.ne.s32.totalorder %s157, %s159
      %p166 = scmp.eq.s32.totalorder %s23, 1
      %p167 = por %p165, %p166
      %p168 = scmp.ne.s32.totalorder %s159, %s160
      %p169 = scmp.eq.s32.totalorder %s23, 0
      %p170 = por %p168, %p169
      %p171 = scmp.ne.s32.totalorder %s159, %s160
      %p172 = scmp.eq.s32.totalorder %s24, 1
      %p173 = por %p171, %p172
      %p175 = scmp.ne.s32.totalorder %s160, %s174
      %p176 = scmp.eq.s32.totalorder %s24, 0
      %p177 = por %p175, %p176
      %s179 = sadd.s32 %s178, 1
      %p182 = scmp.eq.s32.totalorder %s18, 1
      %p183 = scmp.ne.s32.totalorder %s178, %s180
      %p184 = scmp.eq.s32.totalorder %s18, 0
      %p185 = por %p183, %p184
      %p186 = scmp.ne.s32.totalorder %s178, %s180
      %p187 = scmp.eq.s32.totalorder %s23, 1
      %p188 = por %p186, %p187
      %p189 = scmp.ne.s32.totalorder %s180, %s181
      %p190 = scmp.eq.s32.totalorder %s23, 0
      %p191 = por %p189, %p190
      %p192 = scmp.ne.s32.totalorder %s180, %s181
      %p193 = scmp.eq.s32.totalorder %s24, 1
      %p194 = por %p192, %p193
      %p196 = scmp.ne.s32.totalorder %s181, %s195
      %p197 = scmp.eq.s32.totalorder %s24, 0
      %p198 = por %p196, %p197
      %s199 = ssub.s32 %s25, %s37
      %s200 = ssub.s32 %s26, %s33
      %s201 = sor.u32 %s199, %s200
      %p202 = scmp.eq.s32.totalorder %s201, 0
      %s204 = sadd.s32 %s203, 1
      %s205 = scalar_select %p202, %s203, %s204
      %p208 = pneg %p202
      %p209 = scmp.eq.s32.totalorder %s18, 1
      %p210 = por %p208, %p209
      %p211 = scmp.ne.s32.totalorder %s203, %s206
      %p212 = scmp.eq.s32.totalorder %s18, 0
      %p213 = por %p211, %p212
      %p214 = scmp.ne.s32.totalorder %s203, %s206
      %p215 = scmp.eq.s32.totalorder %s23, 1
      %p216 = por %p214, %p215
      %p217 = scmp.ne.s32.totalorder %s206, %s207
      %p218 = scmp.eq.s32.totalorder %s23, 0
      %p219 = por %p217, %p218
      %p220 = scmp.ne.s32.totalorder %s206, %s207
      %p221 = scmp.eq.s32.totalorder %s24, 1
      %p222 = por %p220, %p221
      %p224 = scmp.ne.s32.totalorder %s207, %s223
      %p225 = scmp.eq.s32.totalorder %s24, 0
      %p226 = por %p224, %p225
      %p227 = scmp.le.s32.totalorder 1, %s18
      %p228 = scmp.lt.s32.totalorder %s18, 3
      %p229 = pnand %p227, %p228
      %p230 = pneg %p229
      // Predicated region
      $region9: #{tpu_custom_call.1} parent=5 // pred_check
        _
      $region10: #{tpu_custom_call.1} parent=5 // pred_check_branch
        %232 = sbr.rel (%p229) target = $region12
      $region11: #{tpu_custom_call.1} parent=5 // pred_region
        %s233 = ssub.s32 %s18, 1
        // Predicated region
        $region13: #{tpu_custom_call.1} parent=11 // pred_check
          %p234 = pneg %p107
        $region14: #{tpu_custom_call.1} parent=11 // pred_check_branch
          %236 = sbr.rel (%p234) target = $region16
        $region15: #{tpu_custom_call.1} parent=11 // pred_region
          _
        $region16: #{tpu_custom_call.1} parent=11 // pred_fallthru
          _
        // Predicated region
        $region17: #{tpu_custom_call.1} parent=11 // pred_check
          %p237 = pneg %p128
        $region18: #{tpu_custom_call.1} parent=11 // pred_check_branch
          %239 = sbr.rel (%p237) target = $region20
        $region19: #{tpu_custom_call.1} parent=11 // pred_region
          _
        $region20: #{tpu_custom_call.1} parent=11 // pred_fallthru
          _
        // Predicated region
        $region21: #{tpu_custom_call.1} parent=11 // pred_check
          %p240 = pneg %p149
        $region22: #{tpu_custom_call.1} parent=11 // pred_check_branch
          %242 = sbr.rel (%p240) target = $region24
        $region23: #{tpu_custom_call.1} parent=11 // pred_region
          _
        $region24: #{tpu_custom_call.1} parent=11 // pred_fallthru
          _
        // Predicated region
        $region25: #{tpu_custom_call.1} parent=11 // pred_check
          %p243 = pneg %p170
        $region26: #{tpu_custom_call.1} parent=11 // pred_check_branch
          %245 = sbr.rel (%p243) target = $region28
        $region27: #{tpu_custom_call.1} parent=11 // pred_region
          _
        $region28: #{tpu_custom_call.1} parent=11 // pred_fallthru
          _
        // Predicated region
        $region29: #{tpu_custom_call.1} parent=11 // pred_check
          %p246 = pneg %p191
        $region30: #{tpu_custom_call.1} parent=11 // pred_check_branch
          %248 = sbr.rel (%p246) target = $region32
        $region31: #{tpu_custom_call.1} parent=11 // pred_region
          _
        $region32: #{tpu_custom_call.1} parent=11 // pred_fallthru
          _
      $region12: #{tpu_custom_call.1} parent=5 // pred_fallthru
        _
      %p249 = scmp.lt.s32.totalorder %s18, 2
      // Predicated region
      $region33: #{tpu_custom_call.1} parent=5 // pred_check
        %p250 = pneg %p249
      $region34: #{tpu_custom_call.1} parent=5 // pred_check_branch
        %252 = sbr.rel (%p250) target = $region36
      $region35: #{tpu_custom_call.1} parent=5 // pred_region
        // Predicated region
        $region37: #{tpu_custom_call.1} parent=35 // pred_check
          %p253 = pneg %p52
        $region38: #{tpu_custom_call.1} parent=35 // pred_check_branch
          %255 = sbr.rel (%p253) target = $region40
        $region39: #{tpu_custom_call.1} parent=35 // pred_region
          %p256 = scmp.lt.s32.totalorder %s25, 1
          %s257 = scalar_select %p256, %s25, 1
          %p258 = scmp.lt.s32.totalorder %s26, 0
          %s259 = scalar_select %p258, %s26, 0
          %s260 = sadd.s32 %s259, %s257
          %s261 = smul.addr %s260, 8
          %s262 = scalar_lea.vmem %s0, %s261
        $region40: #{tpu_custom_call.1} parent=35 // pred_fallthru
          _
        // Predicated region
        $region41: #{tpu_custom_call.1} parent=35 // pred_check
          %p263 = pneg %p80
        $region42: #{tpu_custom_call.1} parent=35 // pred_check_branch
          %265 = sbr.rel (%p263) target = $region44
        $region43: #{tpu_custom_call.1} parent=35 // pred_region
          %p266 = scmp.lt.s32.totalorder %s25, 1
          %s267 = scalar_select %p266, %s25, 1
          %p268 = scmp.lt.s32.totalorder %s26, 0
          %s269 = scalar_select %p268, %s26, 0
          %s270 = sadd.s32 %s269, %s267
          %s271 = smul.addr %s270, 4
          %s272 = scalar_lea.vmem %s1, %s271
        $region44: #{tpu_custom_call.1} parent=35 // pred_fallthru
          _
      $region36: #{tpu_custom_call.1} parent=5 // pred_fallthru
        _
      %p273 = scmp.le.s32.totalorder 1, %s18
      %p274 = scmp.lt.s32.totalorder %s18, 3
      %p275 = pnand %p273, %p274
      %p276 = pneg %p275
      // Predicated region
      $region45: #{tpu_custom_call.1} parent=5 // pred_check
        _
      $region46: #{tpu_custom_call.1} parent=5 // pred_check_branch
        %278 = sbr.rel (%p275) target = $region48
      $region47: #{tpu_custom_call.1} parent=5 // pred_region
        %s279 = ssub.s32 %s18, 1
        %p280 = scmp.lt.s32.totalorder %s27, 1
        %s281 = scalar_select %p280, %s27, 1
        %p282 = scmp.lt.s32.totalorder %s28, 0
        %s283 = scalar_select %p282, %s28, 0
        %s284 = sadd.s32 %s283, %s281
        %s285 = smul.addr %s284, 8
        %s286 = scalar_lea.vmem %s0, %s285
        %p287 = pneg %p58
        %p288 = pneg %p55
        %p289 = scmp.lt.s32.totalorder %s27, 1
        %s290 = scalar_select %p289, %s27, 1
        %p291 = scmp.lt.s32.totalorder %s28, 0
        %s292 = scalar_select %p291, %s28, 0
        %s293 = sadd.s32 %s292, %s290
        %s294 = smul.addr %s293, 4
        %s295 = scalar_lea.vmem %s1, %s294
        %p296 = pneg %p86
        %p297 = pneg %p83
        %p298 = pneg %p107
        %p299 = pneg %p104
        %p300 = pneg %p128
        %p301 = pneg %p125
        %p302 = pneg %p149
        %p303 = pneg %p146
        %p304 = pneg %p170
        %p305 = pneg %p167
        %p306 = pneg %p191
        %p307 = pneg %p188
        %p308 = pneg %p219
        %p309 = pneg %p216
        %s310 = sand.u32 %s206, 1
        %s311 = scalar_lea.sflag [#allocation4], %s310
        %s312 = sand.u32 %s206, 1
        %s313 = scalar_lea.vmem [#allocation3], %s312
        %p314 = scmp.lt.s32.totalorder %s27, 1
        %s315 = scalar_select %p314, %s27, 1
        %p316 = scmp.lt.s32.totalorder %s28, 0
        %s317 = scalar_select %p316, %s28, 0
        %s318 = sadd.s32 %s317, %s315
        %s319 = smul.addr %s318, 8
        %s320 = scalar_lea.vmem %s0, %s319
        %p321 = scmp.lt.s32.totalorder %s27, 1
        %s322 = scalar_select %p321, %s27, 1
        %p323 = scmp.lt.s32.totalorder %s28, 0
        %s324 = scalar_select %p323, %s28, 0
        %s325 = sadd.s32 %s324, %s322
        %s326 = smul.addr %s325, 4
        %s327 = scalar_lea.vmem %s1, %s326
        %v328 = vld [vmem:[%s2] sm:$0xff]
        %v329 = vld [vmem:[%s320] sm:$0x3f]
        %v330 = vld [vmem:[%s3] sm:$0xff]
        %v331 = vld [vmem:[%s327] sm:$0xf]
        %vm332 = vcmask 31744
        %v334 = vsel %vm332, %v330, 0
        %vm336 = vcmask 1043456
        %v338 = vsel %vm336, %v331, 0
        %340 = vmatprep.subr.mxu0 0.0
        %341 = vmatpush1.msra.mxu0 %v338
        %342 = vmatprep.subr.mxu0 0.0
        %343 = vmatpush1.msra.mxu0 0.0
        %344 = vmatprep.subr.mxu0 0.0
        %345 = vmatpush1.msra.mxu0 0.0
        %346 = vmatprep.subr.mxu0 0.0
        %347 = vmatpush1.msra.mxu0 0.0
        %348 = vmatprep.subr.mxu0 0.0
        %349 = vmatpush1.msra.mxu0 0.0
        %350 = vmatprep.subr.mxu0 0.0
        %351 = vmatpush1.msra.mxu0 0.0
        %352 = vmatprep.subr.mxu0 0.0
        %353 = vmatpush1.msra.mxu0 0.0
        %354 = vmatprep.subr.mxu0 0.0
        %355 = vmatpush1.msra.mxu0 0.0
        %356 = vmatprep.subr.mxu0 0.0
        %357 = vmatpush1.msra.mxu0 0.0
        %358 = vmatprep.subr.mxu0 0.0
        %359 = vmatpush1.msra.mxu0 0.0
        %360 = vmatprep.subr.mxu0 0.0
        %361 = vmatpush1.msra.mxu0 0.0
        %362 = vmatprep.subr.mxu0 0.0
        %363 = vmatpush1.msra.mxu0 0.0
        %364 = vmatprep.subr.mxu0 0.0
        %365 = vmatpush1.msra.mxu0 0.0
        %366 = vmatprep.subr.mxu0 0.0
        %367 = vmatpush1.msra.mxu0 0.0
        %368 = vmatprep.subr.mxu0 0.0
        %369 = vmatpush1.msra.mxu0 0.0
        %370 = vmatprep.subr.mxu0 0.0
        %371 = vmatpush1.msra.mxu0 0.0
        %372 = vmatprep.subr.mxu0 0.0
        %373 = vmatpush1.msra.mxu0 0.0
        %374 = vmatprep.subr.mxu0 0.0
        %375 = vmatpush1.msra.mxu0 0.0
        %376 = vmatprep.subr.mxu0 0.0
        %377 = vmatpush1.msra.mxu0 0.0
        %378 = vmatprep.subr.mxu0 0.0
        %379 = vmatpush1.msra.mxu0 0.0
        %380 = vmatprep.subr.mxu0 0.0
        %381 = vmatpush1.msra.mxu0 0.0
        %382 = vmatprep.subr.mxu0 0.0
        %383 = vmatpush1.msra.mxu0 0.0
        %384 = vmatprep.subr.mxu0 0.0
        %385 = vmatpush1.msra.mxu0 0.0
        %386 = vmatprep.subr.mxu0 0.0
        %387 = vmatpush1.msra.mxu0 0.0
        %388 = vmatprep.subr.mxu0 0.0
        %389 = vmatpush1.msra.mxu0 0.0
        %390 = vmatprep.subr.mxu0 0.0
        %391 = vmatpush1.msra.mxu0 0.0
        %392 = vmatprep.subr.mxu0 0.0
        %393 = vmatpush1.msra.mxu0 0.0
        %394 = vmatprep.subr.mxu0 0.0
        %395 = vmatpush1.msra.mxu0 0.0
        %396 = vmatprep.subr.mxu0 0.0
        %397 = vmatpush1.msra.mxu0 0.0
        %398 = vmatprep.subr.mxu0 0.0
        %399 = vmatpush1.msra.mxu0 0.0
        %400 = vmatprep.subr.mxu0 0.0
        %401 = vmatpush1.msra.mxu0 0.0
        %402 = vmatprep.subr.mxu0 0.0
        %403 = vmatpush1.msra.mxu0 0.0
        %404 = vmatprep.mubr.f32.mxu0 0.0
        %405 = vmatmul.mubr.f32.gmra.mrb[0].mxu0 %v334
        %v406 = vpop.f32.mrb[0].mxu0
        %v407 = vadd.f32 0.0, %v406
        %v408 = vpop.f32.mrb[0].mxu0
        %409 = vdwg.mxu0
        %vm410 = vcmask 48128
        %v412 = vsel %vm410, %v328, 0
        %vm414 = vcmask 1045504
        %v416 = vsel %vm414, %v329, 0
        %418 = vmatprep.subr.mxu0 0.0
        %419 = vmatpush1.msra.mxu0 %v416
        %420 = vmatprep.subr.mxu0 0.0
        %421 = vmatpush1.msra.mxu0 0.0
        %422 = vmatprep.subr.mxu0 0.0
        %423 = vmatpush1.msra.mxu0 0.0
        %424 = vmatprep.subr.mxu0 0.0
        %425 = vmatpush1.msra.mxu0 0.0
        %426 = vmatprep.subr.mxu0 0.0
        %427 = vmatpush1.msra.mxu0 0.0
        %428 = vmatprep.subr.mxu0 0.0
        %429 = vmatpush1.msra.mxu0 0.0
        %430 = vmatprep.subr.mxu0 0.0
        %431 = vmatpush1.msra.mxu0 0.0
        %432 = vmatprep.subr.mxu0 0.0
        %433 = vmatpush1.msra.mxu0 0.0
        %434 = vmatprep.subr.mxu0 0.0
        %435 = vmatpush1.msra.mxu0 0.0
        %436 = vmatprep.subr.mxu0 0.0
        %437 = vmatpush1.msra.mxu0 0.0
        %438 = vmatprep.subr.mxu0 0.0
        %439 = vmatpush1.msra.mxu0 0.0
        %440 = vmatprep.subr.mxu0 0.0
        %441 = vmatpush1.msra.mxu0 0.0
        %442 = vmatprep.subr.mxu0 0.0
        %443 = vmatpush1.msra.mxu0 0.0
        %444 = vmatprep.subr.mxu0 0.0
        %445 = vmatpush1.msra.mxu0 0.0
        %446 = vmatprep.subr.mxu0 0.0
        %447 = vmatpush1.msra.mxu0 0.0
        %448 = vmatprep.subr.mxu0 0.0
        %449 = vmatpush1.msra.mxu0 0.0
        %450 = vmatprep.subr.mxu0 0.0
        %451 = vmatpush1.msra.mxu0 0.0
        %452 = vmatprep.subr.mxu0 0.0
        %453 = vmatpush1.msra.mxu0 0.0
        %454 = vmatprep.subr.mxu0 0.0
        %455 = vmatpush1.msra.mxu0 0.0
        %456 = vmatprep.subr.mxu0 0.0
        %457 = vmatpush1.msra.mxu0 0.0
        %458 = vmatprep.subr.mxu0 0.0
        %459 = vmatpush1.msra.mxu0 0.0
        %460 = vmatprep.subr.mxu0 0.0
        %461 = vmatpush1.msra.mxu0 0.0
        %462 = vmatprep.subr.mxu0 0.0
        %463 = vmatpush1.msra.mxu0 0.0
        %464 = vmatprep.subr.mxu0 0.0
        %465 = vmatpush1.msra.mxu0 0.0
        %466 = vmatprep.subr.mxu0 0.0
        %467 = vmatpush1.msra.mxu0 0.0
        %468 = vmatprep.subr.mxu0 0.0
        %469 = vmatpush1.msra.mxu0 0.0
        %470 = vmatprep.subr.mxu0 0.0
        %471 = vmatpush1.msra.mxu0 0.0
        %472 = vmatprep.subr.mxu0 0.0
        %473 = vmatpush1.msra.mxu0 0.0
        %474 = vmatprep.subr.mxu0 0.0
        %475 = vmatpush1.msra.mxu0 0.0
        %476 = vmatprep.subr.mxu0 0.0
        %477 = vmatpush1.msra.mxu0 0.0
        %478 = vmatprep.subr.mxu0 0.0
        %479 = vmatpush1.msra.mxu0 0.0
        %480 = vmatprep.subr.mxu0 0.0
        %481 = vmatpush1.msra.mxu0 0.0
        %482 = vmatprep.mubr.f32.mxu0 0.0
        %483 = vmatmul.mubr.f32.gmra.mrb[0].mxu0 %v412
        %v484 = vpop.f32.mrb[0].mxu0
        %v485 = vadd.f32 %v407, %v484
        %v486 = vpop.f32.mrb[0].mxu0
        %487 = vdwg.mxu0
        %v488 = vld [vmem:[%s4] sm:$0xff]
        %490 = vset.pattern.permute.xlu0 0
        %491 = vperm.xlu0 %490, %v488
        %v492 = vpop.permute.xlu0 %491
        %v494 = vadd.f32 %v485, %v492
        %v495 = vmax.f32 %v494, 0.0
        %v496 = vld [vmem:[%s5] sm:$0xff]
        %498 = vset.pattern.permute.xlu0 0
        %499 = vperm.xlu0 %498, %v496
        %v500 = vpop.permute.xlu0 %499
        %v502 = vmul.f32 %v495, %v500
        %vm503 = vcmask 523264
        %v504 = vsel %vm503, %v502, 0.0
        %v505 = vrot.slane %v504, 4
        %v506 = vadd.f32 %v504, %v505
        %v507 = vrot.slane %v506, 2
        %v508 = vadd.f32 %v506, %v507
        %v509 = vrot.slane %v508, 1
        %v510 = vadd.f32 %v508, %v509
        %v511 = vld [vmem:[#allocation2] sm:$0x1]
        %513 = vset.pattern.permute.xlu0 0
        %514 = vperm.xlu0 %513, %v511
        %v515 = vpop.permute.xlu0 %514
        %v517 = vlaneseq
        %v518 = vshrl.u32 %v517, 7
        %v519 = vsub.s32 0, %v518
        %v520 = vrot.slane %v515, %v519
        %v521 = vadd.f32 %v510, %v520
        %v522 = vxor.u32 %v521, 2147483648
        %v523 = vmul.f32 %v522, 1.442695
        %v524 = vpow.pop %v523
        %v525 = vadd.f32 %v524, 1.0
        %v526 = vrcp.pop %v525
        %v527 = vmul.f32 1.0, %v526
        %vm528 = vcmask 516096
        %529 = vst.msk [vmem:[%s313] sm:$0x1] %vm528, %v527
        %s530 = sand.u32 %s206, 1
        %s531 = scalar_lea.sflag [#allocation4], %s530
        %s532 = sand.u32 %s206, 1
        %s533 = scalar_lea.vmem [#allocation3], %s532
        // Predicated region
        $region49: #{tpu_custom_call.1} parent=47 // pred_check
          %p534 = pneg %p216
        $region50: #{tpu_custom_call.1} parent=47 // pred_check_branch
          %536 = sbr.rel (%p534) target = $region52
        $region51: #{tpu_custom_call.1} parent=47 // pred_region
          %s538 = ssub.s32 16, 16
          %539 = vsyncadd %s531, %s538
          %s540 = sadd.s32 %s28, %s27
          %s541 = smul.addr %s540, 16
          %s542 = scalar_lea.hbm %s7, %s541
          %s544 = sshll.u32 %s533, 4
          %s545 = int_to_ptr.vmem [resolvable:$true] %s544
          %547 = dma.vmem_to_hbm [thread:$0]  %s545, 16, %s542, %s531
        $region52: #{tpu_custom_call.1} parent=47 // pred_fallthru
          _
      $region48: #{tpu_custom_call.1} parent=5 // pred_fallthru
        _
      %p548 = scmp.le.s32.totalorder 2, %s18
      // Predicated region
      $region53: #{tpu_custom_call.1} parent=5 // pred_check
        %p549 = pneg %p548
      $region54: #{tpu_custom_call.1} parent=5 // pred_check_branch
        %551 = sbr.rel (%p549) target = $region56
      $region55: #{tpu_custom_call.1} parent=5 // pred_region
        %s552 = ssub.s32 %s18, 2
        // Predicated region
        $region57: #{tpu_custom_call.1} parent=55 // pred_check
          %p553 = pneg %p222
        $region58: #{tpu_custom_call.1} parent=55 // pred_check_branch
          %555 = sbr.rel (%p553) target = $region60
        $region59: #{tpu_custom_call.1} parent=55 // pred_region
          %s556 = sand.u32 %s207, 1
          %s557 = scalar_lea.sflag [#allocation4], %s556
          %s558 = sand.u32 %s207, 1
          %s559 = scalar_lea.vmem [#allocation3], %s558
          %560 = dma.done %s557, 16
        $region60: #{tpu_custom_call.1} parent=55 // pred_fallthru
          _
      $region56: #{tpu_custom_call.1} parent=5 // pred_fallthru
        _
    $region6: #{tpu_custom_call.1} parent=1 // loop_footer
      %s22 = sadd.s32 1, %s18
    $region7: #{tpu_custom_call.1} parent=1 // loop_footer_branch
      %17 = sbr.rel target = $region3
    $region8: #{tpu_custom_call.1} parent=1 // loop_exit
      _
    %561 = vsyncpa [#allocation4], 1
    %s562 = scalar_lea.sflag [#allocation4], 1
    %563 = vsyncpa %s562, 1

</llo_original>
